<compile_context>
chip_gen: v6e
topology: v6e:2x2x1
jax: 0.10.0
libtpu: 0.0.40
codegen_flags: <defaults>
</compile_context>

<pallas_src>
import jax
import jax.numpy as jnp
from jax.experimental import pallas as pl
from jax.experimental.pallas import tpu as pltpu


def _round_up(x, m):
    return ((x + m - 1) // m) * m


def _patch_embed_kernel(x_ref, w_ref, b_ref, o_ref):
    # x_ref: (TM, K)  w_ref: (K, E)  b_ref: (1, E) f32  o_ref: (TM, E)
    acc = jnp.dot(x_ref[...], w_ref[...], preferred_element_type=jnp.float32)
    o_ref[...] = (acc + b_ref[...]).astype(o_ref.dtype)


def _pick_tile_m(M, target):
    """Row tile: multiple of 8, close to `target`, divides M exactly when possible."""
    target = max(8, (int(target) // 8) * 8)
    M8 = _round_up(M, 8)
    if M8 <= target:
        # Single block would fit; split in two (exactly) when big enough so the
        # v7x megacore has >= 2 parallel grid steps to shard.
        if M >= 512 and M % 16 == 0:
            return M // 2
        return M8
    # Largest multiple-of-8 divisor of M not above the target -> Mp == M,
    # no M-pad HBM pass and no epilogue slice copy.
    for tm in range(target, 127, -8):
        if M % tm == 0:
            return tm
    # No clean divisor: accept a small M-pad with the target tile.
    return target


def patch_embed_pallas(x_nchw, weight, bias, patch_size, *,
                       compute_dtype=None, out_dtype=None, target_tile_m=1024):
    """x_nchw: (B, C, H, W); weight: (E, C, ph, pw); bias: (E,).

    Returns (B, num_patches, E).  compute_dtype: optional dtype (e.g. bf16 —
    recommended default on v5e) for the X/W matmul operands; accumulation and
    the bias add are always f32.  out_dtype: optional output dtype (e.g. bf16
    when the downstream pos-embed/block accepts it; halves the dominant HBM
    write); defaults to x_nchw.dtype to match the PyTorch forward.
    """
    B, C, H, W = x_nchw.shape
    E = weight.shape[0]
    ph = pw = patch_size
    assert H % ph == 0 and W % pw == 0, "H, W must be divisible by patch_size"
    gh, gw = H // ph, W // pw
    num_patches = gh * gw
    M = B * num_patches
    K = C * ph * pw

    out_dtype = jnp.dtype(out_dtype) if out_dtype is not None else jnp.dtype(x_nchw.dtype)
    in_dtype = jnp.dtype(compute_dtype) if compute_dtype is not None else jnp.dtype(x_nchw.dtype)

    # --- patch rearrangement (intended to fuse into the pallas_call X input) --
    # NCHW -> (B, gh, gw, C, ph, pw) -> (M, K); K ordered (C, kh, kw) to match
    # Conv2d's weight flattening.
    xp = x_nchw.reshape(B, C, gh, ph, gw, pw)
    xp = jnp.transpose(xp, (0, 2, 4, 1, 3, 5))
    xmat = xp.reshape(M, K).astype(in_dtype)
    wmat = weight.reshape(E, K).T.astype(in_dtype)          # (K, E)
    bmat = bias.reshape(1, E).astype(jnp.float32)

    in_itemsize = in_dtype.itemsize
    out_itemsize = out_dtype.itemsize

    # --- row tile selection under a VMEM budget ------------------------------
    # X and out tiles double-buffered, W + bias resident, plus an f32 temp.
    budget = 40 << 20
    per_row = 2 * K * in_itemsize + 2 * E * out_itemsize + E * 4
    fixed = 2 * K * E * in_itemsize + 2 * E * 4
    max_tm_vmem = max(128, (budget - fixed) // per_row)
    TM = _pick_tile_m(M, min(target_tile_m, max_tm_vmem))
    Mp = _round_up(M, TM)

    if Mp != M:
        # Only hit when M has no usable divisor; zero rows keep the matmul exact.
        xmat = jnp.pad(xmat, ((0, Mp - M), (0, 0)))

    grid = (Mp // TM,)

    cost = pl.CostEstimate(
        flops=2 * M * K * E,
        transcendentals=0,
        bytes_accessed=(xmat.size * xmat.dtype.itemsize
                        + wmat.size * wmat.dtype.itemsize
                        + bmat.size * bmat.dtype.itemsize
                        + Mp * E * out_itemsize),
    )

    vmem_need = (2 * TM * K * in_itemsize      # X tiles (double buffered)
                 + 2 * K * E * in_itemsize     # resident W (2 bufs worst case)
                 + 2 * E * 4                   # bias
                 + 2 * TM * E * out_itemsize   # output tiles (double buffered)
                 + TM * E * 4)                 # f32 matmul + bias temp
    vmem_limit = int(min(max(vmem_need + (4 << 20), 32 << 20), 48 << 20))

    out = pl.pallas_call(
        _patch_embed_kernel,
        out_shape=jax.ShapeDtypeStruct((Mp, E), out_dtype),
        grid_spec=pltpu.PrefetchScalarGridSpec(
            num_scalar_prefetch=0,
            grid=grid,
            in_specs=[
                pl.BlockSpec((TM, K), lambda i: (i, 0)),   # X: streams over M
                pl.BlockSpec((K, E), lambda i: (0, 0)),    # W: resident in VMEM
                pl.BlockSpec((1, E), lambda i: (0, 0)),    # bias: resident
            ],
            out_specs=pl.BlockSpec((TM, E), lambda i: (i, 0)),
        ),
        compiler_params=pltpu.CompilerParams(
            dimension_semantics=("parallel",),
            vmem_limit_bytes=vmem_limit,
            allow_input_fusion=[True, False, False],
        ),
        cost_estimate=cost,
    )(xmat, wmat, bmat)

    if Mp != M:
        out = out[:M]
    # (M, E) -> (B, num_patches, E) == .flatten(2).transpose(1, 2)
    return out.reshape(B, num_patches, E)


def _conv_reference(x, weight, bias, patch_size):
    E = weight.shape[0]
    ref = jax.lax.conv_general_dilated(
        x, weight,
        window_strides=(patch_size, patch_size),
        padding="VALID",
        dimension_numbers=("NCHW", "OIHW", "NCHW"),
        precision=jax.lax.Precision.HIGHEST,
    ) + bias.reshape(1, E, 1, 1)
    B = x.shape[0]
    return jnp.transpose(ref.reshape(B, E, -1), (0, 2, 1))


if __name__ == "__main__":
    key = jax.random.PRNGKey(0)

    # --- small test (single grid step) ---------------------------------------
    B, C, H, W = 2, 4, 16, 16
    patch_size = 4
    embed_dim = 32

    kx, kw, kb, key = jax.random.split(key, 4)
    x = jax.random.normal(kx, (B, C, H, W), dtype=jnp.float32)
    weight = jax.random.normal(kw, (embed_dim, C, patch_size, patch_size),
                               dtype=jnp.float32) * 0.02
    bias = jax.random.normal(kb, (embed_dim,), dtype=jnp.float32) * 0.02

    out = jax.block_until_ready(patch_embed_pallas(x, weight, bias, patch_size))
    out_bf16 = jax.block_until_ready(
        patch_embed_pallas(x, weight, bias, patch_size, compute_dtype=jnp.bfloat16))

    ref = _conv_reference(x, weight, bias, patch_size)
    num_patches = (H // patch_size) * (W // patch_size)
    assert out.shape == (B, num_patches, embed_dim)
    assert out_bf16.shape == (B, num_patches, embed_dim)
    assert jnp.allclose(out, ref, atol=1e-4, rtol=1e-4)
    assert jnp.allclose(out_bf16, ref, atol=5e-2, rtol=5e-2)

    # --- second test: multi-step M grid, non-128 E, K not a multiple of 128 --
    B2, C2, H2, W2 = 8, 3, 32, 32
    patch2, embed2 = 4, 48
    kx, kw, kb, key = jax.random.split(key, 4)
    x2 = jax.random.normal(kx, (B2, C2, H2, W2), dtype=jnp.float32)
    w2 = jax.random.normal(kw, (embed2, C2, patch2, patch2), dtype=jnp.float32) * 0.02
    b2 = jax.random.normal(kb, (embed2,), dtype=jnp.float32) * 0.02

    out2 = jax.block_until_ready(patch_embed_pallas(x2, w2, b2, patch2))
    ref2 = _conv_reference(x2, w2, b2, patch2)
    np2 = (H2 // patch2) * (W2 // patch2)
    assert out2.shape == (B2, np2, embed2)
    assert jnp.allclose(out2, ref2, atol=1e-4, rtol=1e-4)

    print("KERNEL_OK")
</pallas_src>

<mosaic_0001>
module attributes {stable_mosaic.version = 11 : i64} {
  func.func @_patch_embed_kernel(%arg0: i32, %arg1: memref<32x64xf32, #tpu.memory_space<vmem>>, %arg2: memref<64x32xf32, #tpu.memory_space<vmem>>, %arg3: memref<1x32xf32, #tpu.memory_space<vmem>>, %arg4: memref<32x32xf32, #tpu.memory_space<vmem>>) attributes {dimension_semantics = [#tpu.dimension_semantics<parallel>], iteration_bounds = array<i64: 1>, scalar_prefetch = 0 : i64, scratch_operands = 0 : i64, tpu.core_type = #tpu.core_type<tc>, window_params = [{transform_indices = @transform_0, window_bounds = array<i64: 32, 64>}, {pipeline_mode = #tpu.pipeline_mode<synchronous>, transform_indices = @transform_1, window_bounds = array<i64: 64, 32>}, {pipeline_mode = #tpu.pipeline_mode<synchronous>, transform_indices = @transform_2, window_bounds = array<i64: 1, 32>}, {transform_indices = @transform_3, window_bounds = array<i64: 32, 32>}]} {
    %c0 = arith.constant 0 : index
    %c0_0 = arith.constant 0 : index
    %0 = vector.load %arg1[%c0, %c0_0] : memref<32x64xf32, #tpu.memory_space<vmem>>, vector<32x64xf32>
    %c0_1 = arith.constant 0 : index
    %c0_2 = arith.constant 0 : index
    %1 = vector.load %arg2[%c0_1, %c0_2] : memref<64x32xf32, #tpu.memory_space<vmem>>, vector<64x32xf32>
    %cst = arith.constant dense<0.000000e+00> : vector<32x32xf32>
    %2 = tpu.matmul %0, %1, %cst {dimension_numbers = #tpu.dot_dimension_numbers<[1], [0], [0], [1], [0, 0, 1, 1], [], []>} : vector<32x64xf32>, vector<64x32xf32>, vector<32x32xf32> -> vector<32x32xf32>
    %c0_3 = arith.constant 0 : index
    %c0_4 = arith.constant 0 : index
    %3 = vector.load %arg3[%c0_3, %c0_4] : memref<1x32xf32, #tpu.memory_space<vmem>>, vector<1x32xf32>
    %4 = vector.broadcast %3 : vector<1x32xf32> to vector<32x32xf32>
    %5 = arith.addf %2, %4 : vector<32x32xf32>
    %c0_5 = arith.constant 0 : index
    %c0_6 = arith.constant 0 : index
    %6 = vector.load %arg4[%c0_5, %c0_6] : memref<32x32xf32, #tpu.memory_space<vmem>>, vector<32x32xf32>
    tpu.vector_store %arg4[%c0_5, %c0_6], %5 {strides = array<i32>} : memref<32x32xf32, #tpu.memory_space<vmem>>, vector<32x32xf32>,
    return
  }
  func.func @transform_0(%arg0: i32) -> (i32, i32) {
    %c0_i32 = arith.constant 0 : i32
    %c0_i32_0 = arith.constant 0 : i32
    return %arg0, %c0_i32 : i32, i32
  }
  func.func @transform_1(%arg0: i32) -> (i32, i32) {
    %c0_i32 = arith.constant 0 : i32
    %c0_i32_0 = arith.constant 0 : i32
    %c0_i32_1 = arith.constant 0 : i32
    return %c0_i32, %c0_i32_0 : i32, i32
  }
  func.func @transform_2(%arg0: i32) -> (i32, i32) {
    %c0_i32 = arith.constant 0 : i32
    %c0_i32_0 = arith.constant 0 : i32
    %c0_i32_1 = arith.constant 0 : i32
    return %c0_i32, %c0_i32_0 : i32, i32
  }
  func.func @transform_3(%arg0: i32) -> (i32, i32) {
    %c0_i32 = arith.constant 0 : i32
    %c0_i32_0 = arith.constant 0 : i32
    return %arg0, %c0_i32 : i32, i32
  }
}

</mosaic_0001>

<llo_original>
// kernel: tpu_custom_call.1
$region0: #{tpu_custom_call.1}
  #allocation0 [shape = 'u32[]', space=smem, size = 0x4, offset = 0x4, fixed_abs, tag = 'smem constant byte address 0x4 - core index']
  #allocation1 [shape = 'u32[144,128]{1,0:T(1,128)}', space=vmem, size = 0x12000, scoped, tag = 'internal scratch']
  %s0 = inlined_call_operand.vmem [shape: f32[32,64], index: 0, kind: input, shape index: {}]
  %s1 = inlined_call_operand.vmem [shape: f32[64,32], index: 1, kind: input, shape index: {}]
  %s2 = inlined_call_operand.vmem [shape: f32[1,32], index: 2, kind: input, shape index: {}]
  %s3 = inlined_call_operand.hbm [shape: f32[32,32], index: 3, kind: output, shape index: {}]
  %s4 = sld [smem:[#allocation0]]
  $region22: #{tpu_custom_call.1} parent=0
    _
  %s6 = ssub.s32 1, %s4
  %s7 = scalar_select 0, %s6, %s4
  $region1: #{tpu_custom_call.1} parent=0
    #allocation2 [shape = 'u8[16384]{0}', space=vmem, size = 0x4000, scoped, tag = 'output window, operand 0, single buffered']
    #allocation3 [shape = 's32[1]{0}', space=sflag, size = 0x4, scoped, tag = 'scoped memory for tpu_custom_call.1']
    %8 = vsyncpa [#allocation3], 0
    // Predicated region
    $region2: #{tpu_custom_call.1} parent=1 // pred_check
      _
    $region3: #{tpu_custom_call.1} parent=1 // pred_check_branch
      %10 = sbr.rel (0) target = $region5
    $region4: #{tpu_custom_call.1} parent=1 // pred_region
      _
    $region5: #{tpu_custom_call.1} parent=1 // pred_fallthru
      _
    // Predicated region
    $region6: #{tpu_custom_call.1} parent=1 // pred_check
      _
    $region7: #{tpu_custom_call.1} parent=1 // pred_check_branch
      %12 = sbr.rel (0) target = $region9
    $region8: #{tpu_custom_call.1} parent=1 // pred_region
      _
    $region9: #{tpu_custom_call.1} parent=1 // pred_fallthru
      _
    // Predicated region
    $region10: #{tpu_custom_call.1} parent=1 // pred_check
      _
    $region11: #{tpu_custom_call.1} parent=1 // pred_check_branch
      %14 = sbr.rel (0) target = $region13
    $region12: #{tpu_custom_call.1} parent=1 // pred_region
      _
    $region13: #{tpu_custom_call.1} parent=1 // pred_fallthru
      _
    %v15 = vld [vmem:[%s0] sm:$0xff]
    %v16 = vld [vmem:[%s0 + $0x8] sm:$0xff]
    %v17 = vld [vmem:[%s0 + $0x10] sm:$0xff]
    %v18 = vld [vmem:[%s0 + $0x18] sm:$0xff]
    %v19 = vld [vmem:[%s1] sm:$0xff]
    %v20 = vld [vmem:[%s1 + $0x8] sm:$0xff]
    %v21 = vld [vmem:[%s1 + $0x10] sm:$0xff]
    %v22 = vld [vmem:[%s1 + $0x18] sm:$0xff]
    %v23 = vld [vmem:[%s1 + $0x20] sm:$0xff]
    %v24 = vld [vmem:[%s1 + $0x28] sm:$0xff]
    %v25 = vld [vmem:[%s1 + $0x30] sm:$0xff]
    %v26 = vld [vmem:[%s1 + $0x38] sm:$0xff]
    %v27 = vld [vmem:[%s2] sm:$0x1]
    %v29 = vlaneseq
    %v30 = vshrl.u32 %v29, 7
    %v31 = vsub.s32 0, %v30
    %v32 = vrot.slane %v27, %v31
    %vm34 = vcmask 523264
    %v36 = vsel %vm34, %v15, 0
    %v39 = vsel %vm34, %v16, 0
    %v42 = vsel %vm34, %v17, 0
    %v45 = vsel %vm34, %v18, 0
    %47 = vmatprep.subr.mxu0 0.0
    %48 = vmatpush1.msra.mxu0 0.0
    %49 = vmatprep.subr.mxu0 0.0
    %50 = vmatpush1.msra.mxu0 0.0
    %51 = vmatprep.subr.mxu0 0.0
    %52 = vmatpush1.msra.mxu0 0.0
    %53 = vmatprep.subr.mxu0 0.0
    %54 = vmatpush1.msra.mxu0 0.0
    %55 = vmatprep.subr.mxu0 0.0
    %56 = vmatpush1.msra.mxu0 0.0
    %57 = vmatprep.subr.mxu0 0.0
    %58 = vmatpush1.msra.mxu0 0.0
    %59 = vmatprep.subr.mxu0 0.0
    %60 = vmatpush1.msra.mxu0 0.0
    %61 = vmatprep.subr.mxu0 0.0
    %62 = vmatpush1.msra.mxu0 0.0
    %63 = vmatprep.subr.mxu0 0.0
    %64 = vmatpush1.msra.mxu0 %v26
    %65 = vmatprep.subr.mxu0 0.0
    %66 = vmatpush1.msra.mxu0 %v25
    %67 = vmatprep.subr.mxu0 0.0
    %68 = vmatpush1.msra.mxu0 %v24
    %69 = vmatprep.subr.mxu0 0.0
    %70 = vmatpush1.msra.mxu0 %v23
    %71 = vmatprep.subr.mxu0 0.0
    %72 = vmatpush1.msra.mxu0 %v22
    %73 = vmatprep.subr.mxu0 0.0
    %74 = vmatpush1.msra.mxu0 %v21
    %75 = vmatprep.subr.mxu0 0.0
    %76 = vmatpush1.msra.mxu0 %v20
    %77 = vmatprep.subr.mxu0 0.0
    %78 = vmatpush1.msra.mxu0 %v19
    %79 = vmatprep.subr.mxu0 0.0
    %80 = vmatpush2.msra.mxu0 0.0
    %81 = vmatprep.subr.mxu0 0.0
    %82 = vmatpush2.msra.mxu0 0.0
    %83 = vmatprep.subr.mxu0 0.0
    %84 = vmatpush2.msra.mxu0 0.0
    %85 = vmatprep.subr.mxu0 0.0
    %86 = vmatpush2.msra.mxu0 0.0
    %87 = vmatprep.subr.mxu0 0.0
    %88 = vmatpush2.msra.mxu0 0.0
    %89 = vmatprep.subr.mxu0 0.0
    %90 = vmatpush2.msra.mxu0 0.0
    %91 = vmatprep.subr.mxu0 0.0
    %92 = vmatpush2.msra.mxu0 0.0
    %93 = vmatprep.subr.mxu0 0.0
    %94 = vmatpush2.msra.mxu0 0.0
    %95 = vmatprep.subr.mxu0 0.0
    %96 = vmatpush2.msra.mxu0 0.0
    %97 = vmatprep.subr.mxu0 0.0
    %98 = vmatpush2.msra.mxu0 0.0
    %99 = vmatprep.subr.mxu0 0.0
    %100 = vmatpush2.msra.mxu0 0.0
    %101 = vmatprep.subr.mxu0 0.0
    %102 = vmatpush2.msra.mxu0 0.0
    %103 = vmatprep.subr.mxu0 0.0
    %104 = vmatpush2.msra.mxu0 0.0
    %105 = vmatprep.subr.mxu0 0.0
    %106 = vmatpush2.msra.mxu0 0.0
    %107 = vmatprep.subr.mxu0 0.0
    %108 = vmatpush2.msra.mxu0 0.0
    %109 = vmatprep.subr.mxu0 0.0
    %110 = vmatpush2.msra.mxu0 0.0
    %111 = vmatprep.mubr.f32.mxu0 0.0
    %112 = vmatmul.mubr.f32.gmra.mxu0 %v36
    %v113 = vpop.f32.mrf.mxu0
    %v114 = vadd.f32 %v32, %v113
    %v115 = vpop.f32.mrf.mxu0
    %116 = vmatprep.mubr.f32.mxu0 0.0
    %117 = vmatmul.mubr.f32.gmra.mxu0 %v39
    %v118 = vpop.f32.mrf.mxu0
    %v119 = vadd.f32 %v32, %v118
    %v120 = vpop.f32.mrf.mxu0
    %121 = vmatprep.mubr.f32.mxu0 0.0
    %122 = vmatmul.mubr.f32.gmra.mxu0 %v42
    %v123 = vpop.f32.mrf.mxu0
    %v124 = vadd.f32 %v32, %v123
    %v125 = vpop.f32.mrf.mxu0
    %126 = vmatprep.mubr.f32.mxu0 0.0
    %127 = vmatmul.mubr.f32.gmra.mxu0 %v45
    %v128 = vpop.f32.mrf.mxu0
    %v129 = vadd.f32 %v32, %v128
    %v130 = vpop.f32.mrf.mxu0
    %131 = vdwg.mxu0
    %vm132 = vcmask 261120
    %133 = vst.msk [vmem:[#allocation2] sm:$0xff] %vm132, %v114
    %134 = vst.msk [vmem:[#allocation2 + $0x8] sm:$0xff] %vm132, %v119
    %135 = vst.msk [vmem:[#allocation2 + $0x10] sm:$0xff] %vm132, %v124
    %136 = vst.msk [vmem:[#allocation2 + $0x18] sm:$0xff] %vm132, %v129
    // Predicated region
    $region14: #{tpu_custom_call.1} parent=1 // pred_check
      _
    $region15: #{tpu_custom_call.1} parent=1 // pred_check_branch
      %138 = sbr.rel (0) target = $region17
    $region16: #{tpu_custom_call.1} parent=1 // pred_region
      %s140 = ssub.s32 512, 512
      %141 = vsyncadd [#allocation3], %s140
      %s142 = sshll.u32 [#allocation2], 4
      %s143 = int_to_ptr.vmem [resolvable:$true] %s142
      %148 = dma.vmem_to_hbm [thread:$0]  %s143, 512, %s3, [#allocation3], 128, 128, 8
    $region17: #{tpu_custom_call.1} parent=1 // pred_fallthru
      _
    // Predicated region
    $region18: #{tpu_custom_call.1} parent=1 // pred_check
      _
    $region19: #{tpu_custom_call.1} parent=1 // pred_check_branch
      %150 = sbr.rel (0) target = $region21
    $region20: #{tpu_custom_call.1} parent=1 // pred_region
      %151 = dma.done [#allocation3], 512
    $region21: #{tpu_custom_call.1} parent=1 // pred_fallthru
      _
    %152 = vsyncpa [#allocation3], 1

</llo_original>
